<compile_context>
chip_gen: v6e
topology: v6e:2x2x1
jax: 0.10.0
libtpu: 0.0.40
codegen_flags: <defaults>
</compile_context>

<pallas_src>
import jax
import jax.numpy as jnp
from jax.experimental import pallas as pl
from jax.experimental.pallas import tpu as pltpu

CH = 4                      # point channels = (x, y, z, t)
LANES = 128                 # TPU lane width
PTS_PER_ROW = LANES // CH   # 32 points packed per 128-lane row
TILE_ROWS = 256             # 256 rows * 32 pts = 8192 points per grid step
HIDDEN = 32
N_CLASSES = 3               # MOS classes (unlabeled / static / moving)


def _round_up(x, m):
    return (x + m - 1) // m * m


def coord_kernel(pts_ref, qinv_ref, q_ref, out_ref):
    """Lane-dense streaming quantize/rescale of point coordinates.

    pts_ref : (tile_rows, 128) f32 slab, each row packs 32 points x 4 channels.
    qinv_ref: (1, 128) f32, 1/quantization tiled 32x along lanes.
    q_ref   : (1, 128) f32, quantization tiled 32x along lanes.
    """
    pts = pts_ref[...]                              # (tile_rows, 128)
    quantized = pts * qinv_ref[...]                 # torch.div(point_cloud, quantization)
    # out.coordinates[:, 1:] = torch.mul(quantized_coords, quantization)
    out_ref[...] = (quantized * q_ref[...]).astype(out_ref.dtype)


def mos_forward(past_point_clouds, quantization, params):
    """past_point_clouds: list of (Ni, 4) float32 arrays, columns = (x, y, z, t)."""
    # ---- glue: ME.utils.sparse_collate (batch-index column + concatenation) ----
    batch_idx = jnp.concatenate(
        [jnp.full((pc.shape[0], 1), float(i), dtype=pc.dtype)
         for i, pc in enumerate(past_point_clouds)], axis=0)
    points = jnp.concatenate(past_point_clouds, axis=0).astype(jnp.float32)   # (N, 4)
    n = points.shape[0]

    # ---- lane-dense packing: (N, 4) -> (rows, 128), padded so tiling divides ----
    rows = pl.cdiv(n, PTS_PER_ROW)
    tile_rows = min(TILE_ROWS, _round_up(rows, 8))
    padded_rows = _round_up(rows, tile_rows)
    n_pad = padded_rows * PTS_PER_ROW
    pts_pad = jnp.pad(points, ((0, n_pad - n), (0, 0)))
    slab = pts_pad.reshape(padded_rows, LANES)

    q = quantization.astype(jnp.float32).reshape(CH)
    q_row = jnp.tile(q, PTS_PER_ROW).reshape(1, LANES)            # (1, 128)
    qinv_row = jnp.tile(1.0 / q, PTS_PER_ROW).reshape(1, LANES)   # (1, 128)

    coords_slab = pl.pallas_call(
        coord_kernel,
        out_shape=jax.ShapeDtypeStruct((padded_rows, LANES), jnp.float32),
        grid_spec=pltpu.PrefetchScalarGridSpec(
            num_scalar_prefetch=0,
            grid=(padded_rows // tile_rows,),
            in_specs=[
                pl.BlockSpec((tile_rows, LANES), lambda i: (i, 0)),   # point slab tile
                pl.BlockSpec((1, LANES), lambda i: (0, 0)),           # 1/quantization
                pl.BlockSpec((1, LANES), lambda i: (0, 0)),           # quantization
            ],
            out_specs=pl.BlockSpec((tile_rows, LANES), lambda i: (i, 0)),
        ),
        compiler_params=pltpu.CompilerParams(dimension_semantics=("parallel",)),
    )(slab, qinv_row, q_row)

    coords_xyzt = coords_slab.reshape(n_pad, CH)[:n]                  # (N, 4)

    # ---- feature / logits path ----
    # TODO(synk): CustomMinkUNet (MinkowskiEngine sparse generative 4D U-Net with
    # voxel hashing / kernel maps / sparse convolutions) has no clean Pallas
    # equivalent; it is replaced by a pointwise MLP head.  Since the input
    # features are the constant 0.5 for every point, that head reduces to a
    # single constant (1, n_classes) logits row — computed once here (plain JAX)
    # and broadcast, instead of per-point matmuls inside the kernel.
    w1, b1, w2, b2 = params
    feat_row = jnp.full((1, 1), 0.5, jnp.float32)       # features = 0.5 * ones(N, 1)
    h = jnp.maximum(feat_row @ w1 + b1, 0.0)
    logits_row = h @ w2 + b2                            # (1, N_CLASSES)
    logits = jnp.broadcast_to(logits_row, (n, N_CLASSES))

    # out.coordinates = [batch_idx | x y z t], out.features = per-point logits
    out_coordinates = jnp.concatenate([batch_idx, coords_xyzt], axis=1)  # (N, 5)
    return out_coordinates, logits


def init_params(key):
    k1, k2, k3, k4 = jax.random.split(key, 4)
    w1 = 0.1 * jax.random.normal(k1, (1, HIDDEN), jnp.float32)          # in_channels = 1
    b1 = 0.1 * jax.random.normal(k2, (1, HIDDEN), jnp.float32)
    w2 = 0.1 * jax.random.normal(k3, (HIDDEN, N_CLASSES), jnp.float32)
    b2 = 0.1 * jax.random.normal(k4, (1, N_CLASSES), jnp.float32)
    return (w1, b1, w2, b2)


if __name__ == "__main__":
    key = jax.random.PRNGKey(0)
    k_params, k_pc0, k_pc1 = jax.random.split(key, 3)

    # cfg: VOXEL_SIZE = 0.1, DELTA_T_PREDICTION = 0.1
    ds, dt = 0.1, 0.1
    quantization = jnp.array([ds, ds, ds, dt], dtype=jnp.float32)

    # two past point clouds, 8192 points each, columns = (x, y, z, t)
    pc0 = jax.random.uniform(k_pc0, (8192, 4), jnp.float32, minval=-5.0, maxval=5.0)
    pc1 = jax.random.uniform(k_pc1, (8192, 4), jnp.float32, minval=-5.0, maxval=5.0)
    past_point_clouds = [pc0, pc1]

    params = init_params(k_params)

    out_coords, out_logits = mos_forward(past_point_clouds, quantization, params)
    jax.block_until_ready((out_coords, out_logits))

    n_total = pc0.shape[0] + pc1.shape[0]
    assert out_coords.shape == (n_total, 5)
    assert out_logits.shape == (n_total, N_CLASSES)

    # coords[:, 1:] = (pts / q) * q (reciprocal-multiply vs divide, within tolerance)
    ref_pts = jnp.concatenate(past_point_clouds, axis=0)
    ref_coords = (ref_pts / quantization) * quantization
    assert jnp.allclose(out_coords[:, 1:], ref_coords, atol=1e-5)
    # batch-index column from sparse_collate
    assert jnp.allclose(out_coords[:8192, 0], 0.0) and jnp.allclose(out_coords[8192:, 0], 1.0)
    assert jnp.all(jnp.isfinite(out_logits))
    print("KERNEL_OK")
</pallas_src>

<mosaic_0001>
module attributes {stable_mosaic.version = 11 : i64} {
  func.func @coord_kernel(%arg0: i32, %arg1: memref<256x128xf32, #tpu.memory_space<vmem>>, %arg2: memref<1x128xf32, #tpu.memory_space<vmem>>, %arg3: memref<1x128xf32, #tpu.memory_space<vmem>>, %arg4: memref<256x128xf32, #tpu.memory_space<vmem>>) attributes {dimension_semantics = [#tpu.dimension_semantics<parallel>], iteration_bounds = array<i64: 2>, scalar_prefetch = 0 : i64, scratch_operands = 0 : i64, tpu.core_type = #tpu.core_type<tc>, window_params = [{transform_indices = @transform_0, window_bounds = array<i64: 256, 128>}, {pipeline_mode = #tpu.pipeline_mode<synchronous>, transform_indices = @transform_1, window_bounds = array<i64: 1, 128>}, {pipeline_mode = #tpu.pipeline_mode<synchronous>, transform_indices = @transform_2, window_bounds = array<i64: 1, 128>}, {transform_indices = @transform_3, window_bounds = array<i64: 256, 128>}]} {
    %c0 = arith.constant 0 : index
    %c0_0 = arith.constant 0 : index
    %0 = vector.load %arg1[%c0, %c0_0] : memref<256x128xf32, #tpu.memory_space<vmem>>, vector<256x128xf32>
    %c0_1 = arith.constant 0 : index
    %c0_2 = arith.constant 0 : index
    %1 = vector.load %arg2[%c0_1, %c0_2] : memref<1x128xf32, #tpu.memory_space<vmem>>, vector<1x128xf32>
    %2 = vector.broadcast %1 : vector<1x128xf32> to vector<256x128xf32>
    %3 = arith.mulf %0, %2 : vector<256x128xf32>
    %c0_3 = arith.constant 0 : index
    %c0_4 = arith.constant 0 : index
    %4 = vector.load %arg3[%c0_3, %c0_4] : memref<1x128xf32, #tpu.memory_space<vmem>>, vector<1x128xf32>
    %5 = vector.broadcast %4 : vector<1x128xf32> to vector<256x128xf32>
    %6 = arith.mulf %3, %5 : vector<256x128xf32>
    %c0_5 = arith.constant 0 : index
    %c0_6 = arith.constant 0 : index
    %7 = vector.load %arg4[%c0_5, %c0_6] : memref<256x128xf32, #tpu.memory_space<vmem>>, vector<256x128xf32>
    tpu.vector_store %arg4[%c0_5, %c0_6], %6 {strides = array<i32>} : memref<256x128xf32, #tpu.memory_space<vmem>>, vector<256x128xf32>,
    return
  }
  func.func @transform_0(%arg0: i32) -> (i32, i32) {
    %c0_i32 = arith.constant 0 : i32
    %c0_i32_0 = arith.constant 0 : i32
    return %arg0, %c0_i32 : i32, i32
  }
  func.func @transform_1(%arg0: i32) -> (i32, i32) {
    %c0_i32 = arith.constant 0 : i32
    %c0_i32_0 = arith.constant 0 : i32
    %c0_i32_1 = arith.constant 0 : i32
    return %c0_i32, %c0_i32_0 : i32, i32
  }
  func.func @transform_2(%arg0: i32) -> (i32, i32) {
    %c0_i32 = arith.constant 0 : i32
    %c0_i32_0 = arith.constant 0 : i32
    %c0_i32_1 = arith.constant 0 : i32
    return %c0_i32, %c0_i32_0 : i32, i32
  }
  func.func @transform_3(%arg0: i32) -> (i32, i32) {
    %c0_i32 = arith.constant 0 : i32
    %c0_i32_0 = arith.constant 0 : i32
    return %arg0, %c0_i32 : i32, i32
  }
}

</mosaic_0001>

<llo_original>
// kernel: tpu_custom_call.1
$region0: #{tpu_custom_call.1}
  #allocation0 [shape = 'u32[]', space=smem, size = 0x4, offset = 0x4, fixed_abs, tag = 'smem constant byte address 0x4 - core index']
  #allocation1 [shape = 'u32[144,128]{1,0:T(1,128)}', space=vmem, size = 0x12000, scoped, tag = 'internal scratch']
  %s0 = inlined_call_operand.hbm [shape: f32[512,128], index: 0, kind: input, shape index: {}]
  %s1 = inlined_call_operand.vmem [shape: f32[1,128], index: 1, kind: input, shape index: {}]
  %s2 = inlined_call_operand.vmem [shape: f32[1,128], index: 2, kind: input, shape index: {}]
  %s3 = inlined_call_operand.hbm [shape: f32[512,128], index: 3, kind: output, shape index: {}]
  %s4 = sld [smem:[#allocation0]]
  $region49: #{tpu_custom_call.1} parent=0
    _
  %s6 = ssub.s32 1, %s4
  %s7 = scalar_select 0, %s6, %s4
  $region1: #{tpu_custom_call.1} parent=0
    #allocation2 [shape = 'u8[262144]{0}', space=vmem, size = 0x40000, scoped, tag = 'input window, operand 0']
    #allocation3 [shape = 's32[2]{0}', space=sflag, size = 0x8, scoped, tag = 'scoped memory for tpu_custom_call.1']
    #allocation4 [shape = 's32[2]{0}', space=sflag, size = 0x8, scoped, tag = 'scoped memory for tpu_custom_call.1']
    #allocation5 [shape = 'u8[262144]{0}', space=vmem, size = 0x40000, scoped, tag = 'output window, operand 0']
    %8 = vsyncpa [#allocation3], 0
    %s9 = scalar_lea.sflag [#allocation3], 1
    %10 = vsyncpa %s9, 0
    %11 = vsyncpa [#allocation4], 0
    %s12 = scalar_lea.sflag [#allocation4], 1
    %13 = vsyncpa %s12, 0
    loop: start=0, step=1, limit=4
    $region2: #{tpu_custom_call.1} parent=1 // loop_pre_header
      _
    $region3: #{tpu_custom_call.1} parent=1 // loop_header
      %s15 = sphi 0, %s19
      %p16 = scmp.ge.s32.totalorder %s15, 4
      %s25 = sphi 0, %s27
      %s28 = sphi 0, %s25
      %s29 = sphi 0, %s28
      %s45 = sphi 0, %s29
      %s49 = sphi 0, %s49
      %s51 = sphi 0, %s49
      %s52 = sphi 0, %s51
      %s66 = sphi 0, %s52
      %s70 = sphi 0, %s70
      %s72 = sphi 0, %s70
      %s73 = sphi 0, %s72
      %s87 = sphi 0, %s73
      %s93 = sphi 0, %s95
      %s96 = sphi 0, %s93
      %s97 = sphi 0, %s96
      %s113 = sphi 0, %s97
    $region4: #{tpu_custom_call.1} parent=1 // loop_header_branch
      %18 = sbr.rel (%p16) target = $region8
    $region5: #{tpu_custom_call.1} parent=1 // loop_body
      %s20 = ssub.s32 %s15, 1
      %s21 = ssub.s32 %s15, 2
      %s22 = sadd.s32 %s15, 1
      %s23 = ssub.s32 %s15, %s22
      %p24 = scmp.eq.s32.totalorder %s23, 0
      %s26 = sadd.s32 %s25, 1
      %s27 = scalar_select %p24, %s25, %s26
      %p30 = pneg %p24
      %p31 = scmp.eq.s32.totalorder %s15, 1
      %p32 = por %p30, %p31
      %p33 = scmp.ne.s32.totalorder %s25, %s28
      %p34 = scmp.eq.s32.totalorder %s15, 0
      %p35 = por %p33, %p34
      %p36 = scmp.ne.s32.totalorder %s25, %s28
      %p37 = scmp.eq.s32.totalorder %s20, 1
      %p38 = por %p36, %p37
      %p39 = scmp.ne.s32.totalorder %s28, %s29
      %p40 = scmp.eq.s32.totalorder %s20, 0
      %p41 = por %p39, %p40
      %p42 = scmp.ne.s32.totalorder %s28, %s29
      %p43 = scmp.eq.s32.totalorder %s21, 1
      %p44 = por %p42, %p43
      %p46 = scmp.ne.s32.totalorder %s29, %s45
      %p47 = scmp.eq.s32.totalorder %s21, 0
      %p48 = por %p46, %p47
      %s50 = sadd.s32 %s49, 1
      %p53 = scmp.eq.s32.totalorder %s15, 1
      %p54 = scmp.ne.s32.totalorder %s49, %s51
      %p55 = scmp.eq.s32.totalorder %s15, 0
      %p56 = por %p54, %p55
      %p57 = scmp.ne.s32.totalorder %s49, %s51
      %p58 = scmp.eq.s32.totalorder %s20, 1
      %p59 = por %p57, %p58
      %p60 = scmp.ne.s32.totalorder %s51, %s52
      %p61 = scmp.eq.s32.totalorder %s20, 0
      %p62 = por %p60, %p61
      %p63 = scmp.ne.s32.totalorder %s51, %s52
      %p64 = scmp.eq.s32.totalorder %s21, 1
      %p65 = por %p63, %p64
      %p67 = scmp.ne.s32.totalorder %s52, %s66
      %p68 = scmp.eq.s32.totalorder %s21, 0
      %p69 = por %p67, %p68
      %s71 = sadd.s32 %s70, 1
      %p74 = scmp.eq.s32.totalorder %s15, 1
      %p75 = scmp.ne.s32.totalorder %s70, %s72
      %p76 = scmp.eq.s32.totalorder %s15, 0
      %p77 = por %p75, %p76
      %p78 = scmp.ne.s32.totalorder %s70, %s72
      %p79 = scmp.eq.s32.totalorder %s20, 1
      %p80 = por %p78, %p79
      %p81 = scmp.ne.s32.totalorder %s72, %s73
      %p82 = scmp.eq.s32.totalorder %s20, 0
      %p83 = por %p81, %p82
      %p84 = scmp.ne.s32.totalorder %s72, %s73
      %p85 = scmp.eq.s32.totalorder %s21, 1
      %p86 = por %p84, %p85
      %p88 = scmp.ne.s32.totalorder %s73, %s87
      %p89 = scmp.eq.s32.totalorder %s21, 0
      %p90 = por %p88, %p89
      %s91 = ssub.s32 %s15, %s22
      %p92 = scmp.eq.s32.totalorder %s91, 0
      %s94 = sadd.s32 %s93, 1
      %s95 = scalar_select %p92, %s93, %s94
      %p98 = pneg %p92
      %p99 = scmp.eq.s32.totalorder %s15, 1
      %p100 = por %p98, %p99
      %p101 = scmp.ne.s32.totalorder %s93, %s96
      %p102 = scmp.eq.s32.totalorder %s15, 0
      %p103 = por %p101, %p102
      %p104 = scmp.ne.s32.totalorder %s93, %s96
      %p105 = scmp.eq.s32.totalorder %s20, 1
      %p106 = por %p104, %p105
      %p107 = scmp.ne.s32.totalorder %s96, %s97
      %p108 = scmp.eq.s32.totalorder %s20, 0
      %p109 = por %p107, %p108
      %p110 = scmp.ne.s32.totalorder %s96, %s97
      %p111 = scmp.eq.s32.totalorder %s21, 1
      %p112 = por %p110, %p111
      %p114 = scmp.ne.s32.totalorder %s97, %s113
      %p115 = scmp.eq.s32.totalorder %s21, 0
      %p116 = por %p114, %p115
      %p117 = scmp.le.s32.totalorder 1, %s15
      %p118 = scmp.lt.s32.totalorder %s15, 3
      %p119 = pnand %p117, %p118
      %p120 = pneg %p119
      // Predicated region
      $region9: #{tpu_custom_call.1} parent=5 // pred_check
        _
      $region10: #{tpu_custom_call.1} parent=5 // pred_check_branch
        %122 = sbr.rel (%p119) target = $region12
      $region11: #{tpu_custom_call.1} parent=5 // pred_region
        %s123 = ssub.s32 %s15, 1
        // Predicated region
        $region13: #{tpu_custom_call.1} parent=11 // pred_check
          %p124 = pneg %p62
        $region14: #{tpu_custom_call.1} parent=11 // pred_check_branch
          %126 = sbr.rel (%p124) target = $region16
        $region15: #{tpu_custom_call.1} parent=11 // pred_region
          _
        $region16: #{tpu_custom_call.1} parent=11 // pred_fallthru
          _
        // Predicated region
        $region17: #{tpu_custom_call.1} parent=11 // pred_check
          %p127 = pneg %p83
        $region18: #{tpu_custom_call.1} parent=11 // pred_check_branch
          %129 = sbr.rel (%p127) target = $region20
        $region19: #{tpu_custom_call.1} parent=11 // pred_region
          _
        $region20: #{tpu_custom_call.1} parent=11 // pred_fallthru
          _
      $region12: #{tpu_custom_call.1} parent=5 // pred_fallthru
        _
      %p130 = scmp.lt.s32.totalorder %s15, 2
      // Predicated region
      $region21: #{tpu_custom_call.1} parent=5 // pred_check
        %p131 = pneg %p130
      $region22: #{tpu_custom_call.1} parent=5 // pred_check_branch
        %133 = sbr.rel (%p131) target = $region24
      $region23: #{tpu_custom_call.1} parent=5 // pred_region
        // Predicated region
        $region25: #{tpu_custom_call.1} parent=23 // pred_check
          %p134 = pneg %p35
        $region26: #{tpu_custom_call.1} parent=23 // pred_check_branch
          %136 = sbr.rel (%p134) target = $region28
        $region27: #{tpu_custom_call.1} parent=23 // pred_region
          %s137 = sand.u32 %s25, 1
          %s138 = scalar_lea.sflag [#allocation3], %s137
          %s139 = sand.u32 %s25, 1
          %s140 = smul.addr %s139, 256
          %s141 = scalar_lea.vmem [#allocation2], %s140
          %s142 = smul.u32 32, %s15
          %s144 = ssub.s32 4096, 4096
          %145 = vsyncadd %s138, %s144
          %s146 = smul.addr %s142, 128
          %s147 = scalar_lea.hbm %s0, %s146
          %s148 = sshll.u32 %s141, 4
          %s149 = int_to_ptr.vmem [resolvable:$true] %s148
          %154 = dma.hbm_to_vmem [thread:$0]  %s147, 4096, %s149, %s138, 128, 128, 8
        $region28: #{tpu_custom_call.1} parent=23 // pred_fallthru
          _
      $region24: #{tpu_custom_call.1} parent=5 // pred_fallthru
        _
      %p155 = scmp.le.s32.totalorder 1, %s15
      %p156 = scmp.lt.s32.totalorder %s15, 3
      %p157 = pnand %p155, %p156
      %p158 = pneg %p157
      // Predicated region
      $region29: #{tpu_custom_call.1} parent=5 // pred_check
        _
      $region30: #{tpu_custom_call.1} parent=5 // pred_check_branch
        %160 = sbr.rel (%p157) target = $region32
      $region31: #{tpu_custom_call.1} parent=5 // pred_region
        %s161 = ssub.s32 %s15, 1
        %s162 = sand.u32 %s28, 1
        %s163 = scalar_lea.sflag [#allocation3], %s162
        %s164 = sand.u32 %s28, 1
        %s165 = smul.addr %s164, 256
        %s166 = scalar_lea.vmem [#allocation2], %s165
        // Predicated region
        $region33: #{tpu_custom_call.1} parent=31 // pred_check
          %p167 = pneg %p41
        $region34: #{tpu_custom_call.1} parent=31 // pred_check_branch
          %169 = sbr.rel (%p167) target = $region36
        $region35: #{tpu_custom_call.1} parent=31 // pred_region
          %170 = dma.done %s163, 4096
        $region36: #{tpu_custom_call.1} parent=31 // pred_fallthru
          _
        %s171 = sand.u32 %s28, 1
        %s172 = scalar_lea.sflag [#allocation3], %s171
        %s173 = sand.u32 %s28, 1
        %s174 = smul.addr %s173, 256
        %s175 = scalar_lea.vmem [#allocation2], %s174
        %p176 = pneg %p41
        %p177 = pneg %p38
        %p178 = pneg %p62
        %p179 = pneg %p59
        %p180 = pneg %p83
        %p181 = pneg %p80
        %p182 = pneg %p109
        %p183 = pneg %p106
        %s184 = sand.u32 %s96, 1
        %s185 = scalar_lea.sflag [#allocation4], %s184
        %s186 = sand.u32 %s96, 1
        %s187 = smul.addr %s186, 256
        %s188 = scalar_lea.vmem [#allocation5], %s187
        %s189 = smul.u32 32, %s20
        %s190 = smul.u32 32, %s20
        %v191 = vld [vmem:[%s166] sm:$0xff]
        %v192 = vld [vmem:[%s166 + $0x8] sm:$0xff]
        %v193 = vld [vmem:[%s166 + $0x10] sm:$0xff]
        %v194 = vld [vmem:[%s166 + $0x18] sm:$0xff]
        %v195 = vld [vmem:[%s166 + $0x20] sm:$0xff]
        %v196 = vld [vmem:[%s166 + $0x28] sm:$0xff]
        %v197 = vld [vmem:[%s166 + $0x30] sm:$0xff]
        %v198 = vld [vmem:[%s166 + $0x38] sm:$0xff]
        %v199 = vld [vmem:[%s166 + $0x40] sm:$0xff]
        %v200 = vld [vmem:[%s166 + $0x48] sm:$0xff]
        %v201 = vld [vmem:[%s166 + $0x50] sm:$0xff]
        %v202 = vld [vmem:[%s166 + $0x58] sm:$0xff]
        %v203 = vld [vmem:[%s166 + $0x60] sm:$0xff]
        %v204 = vld [vmem:[%s166 + $0x68] sm:$0xff]
        %v205 = vld [vmem:[%s166 + $0x70] sm:$0xff]
        %v206 = vld [vmem:[%s166 + $0x78] sm:$0xff]
        %v207 = vld [vmem:[%s166 + $0x80] sm:$0xff]
        %v208 = vld [vmem:[%s166 + $0x88] sm:$0xff]
        %v209 = vld [vmem:[%s166 + $0x90] sm:$0xff]
        %v210 = vld [vmem:[%s166 + $0x98] sm:$0xff]
        %v211 = vld [vmem:[%s166 + $0xa0] sm:$0xff]
        %v212 = vld [vmem:[%s166 + $0xa8] sm:$0xff]
        %v213 = vld [vmem:[%s166 + $0xb0] sm:$0xff]
        %v214 = vld [vmem:[%s166 + $0xb8] sm:$0xff]
        %v215 = vld [vmem:[%s166 + $0xc0] sm:$0xff]
        %v216 = vld [vmem:[%s166 + $0xc8] sm:$0xff]
        %v217 = vld [vmem:[%s166 + $0xd0] sm:$0xff]
        %v218 = vld [vmem:[%s166 + $0xd8] sm:$0xff]
        %v219 = vld [vmem:[%s166 + $0xe0] sm:$0xff]
        %v220 = vld [vmem:[%s166 + $0xe8] sm:$0xff]
        %v221 = vld [vmem:[%s166 + $0xf0] sm:$0xff]
        %v222 = vld [vmem:[%s166 + $0xf8] sm:$0xff]
        %v223 = vld [vmem:[%s1] sm:$0x1]
        %v225 = vlaneseq
        %v226 = vshrl.u32 %v225, 7
        %v227 = vsub.s32 0, %v226
        %v228 = vrot.slane %v223, %v227
        %v230 = vmul.f32 %v191, %v228
        %v231 = vmul.f32 %v192, %v228
        %v232 = vmul.f32 %v193, %v228
        %v233 = vmul.f32 %v194, %v228
        %v234 = vmul.f32 %v195, %v228
        %v235 = vmul.f32 %v196, %v228
        %v236 = vmul.f32 %v197, %v228
        %v237 = vmul.f32 %v198, %v228
        %v238 = vmul.f32 %v199, %v228
        %v239 = vmul.f32 %v200, %v228
        %v240 = vmul.f32 %v201, %v228
        %v241 = vmul.f32 %v202, %v228
        %v242 = vmul.f32 %v203, %v228
        %v243 = vmul.f32 %v204, %v228
        %v244 = vmul.f32 %v205, %v228
        %v245 = vmul.f32 %v206, %v228
        %v246 = vmul.f32 %v207, %v228
        %v247 = vmul.f32 %v208, %v228
        %v248 = vmul.f32 %v209, %v228
        %v249 = vmul.f32 %v210, %v228
        %v250 = vmul.f32 %v211, %v228
        %v251 = vmul.f32 %v212, %v228
        %v252 = vmul.f32 %v213, %v228
        %v253 = vmul.f32 %v214, %v228
        %v254 = vmul.f32 %v215, %v228
        %v255 = vmul.f32 %v216, %v228
        %v256 = vmul.f32 %v217, %v228
        %v257 = vmul.f32 %v218, %v228
        %v258 = vmul.f32 %v219, %v228
        %v259 = vmul.f32 %v220, %v228
        %v260 = vmul.f32 %v221, %v228
        %v261 = vmul.f32 %v222, %v228
        %v262 = vld [vmem:[%s2] sm:$0x1]
        %v264 = vlaneseq
        %v265 = vshrl.u32 %v264, 7
        %v266 = vsub.s32 0, %v265
        %v267 = vrot.slane %v262, %v266
        %v269 = vmul.f32 %v230, %v267
        %v270 = vmul.f32 %v231, %v267
        %v271 = vmul.f32 %v232, %v267
        %v272 = vmul.f32 %v233, %v267
        %v273 = vmul.f32 %v234, %v267
        %v274 = vmul.f32 %v235, %v267
        %v275 = vmul.f32 %v236, %v267
        %v276 = vmul.f32 %v237, %v267
        %v277 = vmul.f32 %v238, %v267
        %v278 = vmul.f32 %v239, %v267
        %v279 = vmul.f32 %v240, %v267
        %v280 = vmul.f32 %v241, %v267
        %v281 = vmul.f32 %v242, %v267
        %v282 = vmul.f32 %v243, %v267
        %v283 = vmul.f32 %v244, %v267
        %v284 = vmul.f32 %v245, %v267
        %v285 = vmul.f32 %v246, %v267
        %v286 = vmul.f32 %v247, %v267
        %v287 = vmul.f32 %v248, %v267
        %v288 = vmul.f32 %v249, %v267
        %v289 = vmul.f32 %v250, %v267
        %v290 = vmul.f32 %v251, %v267
        %v291 = vmul.f32 %v252, %v267
        %v292 = vmul.f32 %v253, %v267
        %v293 = vmul.f32 %v254, %v267
        %v294 = vmul.f32 %v255, %v267
        %v295 = vmul.f32 %v256, %v267
        %v296 = vmul.f32 %v257, %v267
        %v297 = vmul.f32 %v258, %v267
        %v298 = vmul.f32 %v259, %v267
        %v299 = vmul.f32 %v260, %v267
        %v300 = vmul.f32 %v261, %v267
        %301 = vst [vmem:[%s188] sm:$0xff] %v269
        %302 = vst [vmem:[%s188 + $0x8] sm:$0xff] %v270
        %303 = vst [vmem:[%s188 + $0x10] sm:$0xff] %v271
        %304 = vst [vmem:[%s188 + $0x18] sm:$0xff] %v272
        %305 = vst [vmem:[%s188 + $0x20] sm:$0xff] %v273
        %306 = vst [vmem:[%s188 + $0x28] sm:$0xff] %v274
        %307 = vst [vmem:[%s188 + $0x30] sm:$0xff] %v275
        %308 = vst [vmem:[%s188 + $0x38] sm:$0xff] %v276
        %309 = vst [vmem:[%s188 + $0x40] sm:$0xff] %v277
        %310 = vst [vmem:[%s188 + $0x48] sm:$0xff] %v278
        %311 = vst [vmem:[%s188 + $0x50] sm:$0xff] %v279
        %312 = vst [vmem:[%s188 + $0x58] sm:$0xff] %v280
        %313 = vst [vmem:[%s188 + $0x60] sm:$0xff] %v281
        %314 = vst [vmem:[%s188 + $0x68] sm:$0xff] %v282
        %315 = vst [vmem:[%s188 + $0x70] sm:$0xff] %v283
        %316 = vst [vmem:[%s188 + $0x78] sm:$0xff] %v284
        %317 = vst [vmem:[%s188 + $0x80] sm:$0xff] %v285
        %318 = vst [vmem:[%s188 + $0x88] sm:$0xff] %v286
        %319 = vst [vmem:[%s188 + $0x90] sm:$0xff] %v287
        %320 = vst [vmem:[%s188 + $0x98] sm:$0xff] %v288
        %321 = vst [vmem:[%s188 + $0xa0] sm:$0xff] %v289
        %322 = vst [vmem:[%s188 + $0xa8] sm:$0xff] %v290
        %323 = vst [vmem:[%s188 + $0xb0] sm:$0xff] %v291
        %324 = vst [vmem:[%s188 + $0xb8] sm:$0xff] %v292
        %325 = vst [vmem:[%s188 + $0xc0] sm:$0xff] %v293
        %326 = vst [vmem:[%s188 + $0xc8] sm:$0xff] %v294
        %327 = vst [vmem:[%s188 + $0xd0] sm:$0xff] %v295
        %328 = vst [vmem:[%s188 + $0xd8] sm:$0xff] %v296
        %329 = vst [vmem:[%s188 + $0xe0] sm:$0xff] %v297
        %330 = vst [vmem:[%s188 + $0xe8] sm:$0xff] %v298
        %331 = vst [vmem:[%s188 + $0xf0] sm:$0xff] %v299
        %332 = vst [vmem:[%s188 + $0xf8] sm:$0xff] %v300
        %s333 = sand.u32 %s96, 1
        %s334 = scalar_lea.sflag [#allocation4], %s333
        %s335 = sand.u32 %s96, 1
        %s336 = smul.addr %s335, 256
        %s337 = scalar_lea.vmem [#allocation5], %s336
        // Predicated region
        $region37: #{tpu_custom_call.1} parent=31 // pred_check
          %p338 = pneg %p106
        $region38: #{tpu_custom_call.1} parent=31 // pred_check_branch
          %340 = sbr.rel (%p338) target = $region40
        $region39: #{tpu_custom_call.1} parent=31 // pred_region
          %s341 = smul.u32 32, %s20
          %s343 = ssub.s32 4096, 4096
          %344 = vsyncadd %s334, %s343
          %s345 = smul.addr %s341, 128
          %s346 = scalar_lea.hbm %s3, %s345
          %s347 = sshll.u32 %s337, 4
          %s348 = int_to_ptr.vmem [resolvable:$true] %s347
          %353 = dma.vmem_to_hbm [thread:$0]  %s348, 4096, %s346, %s334, 128, 128, 8
        $region40: #{tpu_custom_call.1} parent=31 // pred_fallthru
          _
      $region32: #{tpu_custom_call.1} parent=5 // pred_fallthru
        _
      %p354 = scmp.le.s32.totalorder 2, %s15
      // Predicated region
      $region41: #{tpu_custom_call.1} parent=5 // pred_check
        %p355 = pneg %p354
      $region42: #{tpu_custom_call.1} parent=5 // pred_check_branch
        %357 = sbr.rel (%p355) target = $region44
      $region43: #{tpu_custom_call.1} parent=5 // pred_region
        %s358 = ssub.s32 %s15, 2
        // Predicated region
        $region45: #{tpu_custom_call.1} parent=43 // pred_check
          %p359 = pneg %p112
        $region46: #{tpu_custom_call.1} parent=43 // pred_check_branch
          %361 = sbr.rel (%p359) target = $region48
        $region47: #{tpu_custom_call.1} parent=43 // pred_region
          %s362 = sand.u32 %s97, 1
          %s363 = scalar_lea.sflag [#allocation4], %s362
          %s364 = sand.u32 %s97, 1
          %s365 = smul.addr %s364, 256
          %s366 = scalar_lea.vmem [#allocation5], %s365
          %367 = dma.done %s363, 4096
        $region48: #{tpu_custom_call.1} parent=43 // pred_fallthru
          _
      $region44: #{tpu_custom_call.1} parent=5 // pred_fallthru
        _
    $region6: #{tpu_custom_call.1} parent=1 // loop_footer
      %s19 = sadd.s32 1, %s15
    $region7: #{tpu_custom_call.1} parent=1 // loop_footer_branch
      %14 = sbr.rel target = $region3
    $region8: #{tpu_custom_call.1} parent=1 // loop_exit
      _
    %368 = vsyncpa [#allocation3], 1
    %s369 = scalar_lea.sflag [#allocation3], 1
    %370 = vsyncpa %s369, 1
    %371 = vsyncpa [#allocation4], 1
    %s372 = scalar_lea.sflag [#allocation4], 1
    %373 = vsyncpa %s372, 1

</llo_original>
